<compile_context>
chip_gen: v6e
topology: v6e:2x2x1
jax: 0.10.0
libtpu: 0.0.40
codegen_flags: <defaults>
</compile_context>

<pallas_src>
import functools

import jax
import jax.numpy as jnp
from jax.experimental import pallas as pl
from jax.experimental.pallas import tpu as pltpu

_LANE = 128
_SUBLANE_F32 = 8
_SUBLANE_BF16 = 16


def _round_up(n, m):
    return ((n + m - 1) // m) * m


def _mlp_kernel(n_layers, x_ref, *refs):
    """refs = (w0, b0, w1, b1, ..., w_{L-1}, b_{L-1}, out_ref); all VMEM tiles."""
    out_ref = refs[-1]
    param_refs = refs[:-1]
    assert len(param_refs) == 2 * n_layers

    h = x_ref[...]                                   # f32 activations
    for layer in range(n_layers):                    # static unroll over layers
        w = param_refs[2 * layer][...]
        b = param_refs[2 * layer + 1][...]
        # MXU matmul in the weight dtype (bf16 by default) with f32 accumulation;
        # bias add / ReLU stay f32 (VPU).
        h = jnp.dot(h.astype(w.dtype), w, preferred_element_type=jnp.float32) + b
        if layer < n_layers - 1:                     # ReLU on all but last layer
            h = jnp.maximum(h, 0.0)
    out_ref[...] = h.astype(out_ref.dtype)


def _make_param_specs(shapes):
    """Constant-index (VMEM-resident) param specs; single-buffered when possible."""
    idx = lambda i: (0, 0)
    try:
        specs = [pl.BlockSpec(s, idx, pipeline_mode=pl.Buffered(1)) for s in shapes]
        return specs, 1
    except Exception:                                 # older API: no pipeline_mode
        return [pl.BlockSpec(s, idx) for s in shapes], 2


def _vmem_cap_bytes():
    """Generation-aware usable-VMEM cap (90% of physical), conservative fallback."""
    try:
        cap = int(pltpu.get_tpu_info().vmem_capacity_bytes)
        return max(32 << 20, int(0.9 * cap))
    except Exception:
        return 64 << 20                               # v7x per-TC physical VMEM


def branch_net_forward(x, weights, biases, *, tile_b=None,
                       weight_dtype=jnp.bfloat16, slice_output=True):
    """Run the BranchNet MLP in one Pallas kernel.

    x: (B, input_size) float32
    weights: list of (in, out) float32 arrays (transposed vs PyTorch (out, in))
    biases:  list of (1, out) float32 arrays
    """
    n_layers = len(weights)
    B, in_dim = x.shape
    out_dim = weights[-1].shape[1]
    x = x.astype(jnp.float32)

    # ---- pad param feature dims to 128-lane multiples.  x is NOT padded (the
    #      first weight keeps its true row count), so no extra HBM pass on x.
    #      Padded weight rows / bias cols are zero -> padding cannot leak.   ----
    padded_params = []
    prev_p = in_dim                       # width of the incoming activation
    for w, b in zip(weights, biases):
        fi, fo = w.shape
        fo_p = _round_up(fo, _LANE)
        w_p = jnp.zeros((prev_p, fo_p), weight_dtype).at[:fi, :fo].set(
            w.astype(weight_dtype))
        b_p = jnp.zeros((1, fo_p), jnp.float32).at[:, :fo].set(
            b.astype(jnp.float32))
        padded_params += [w_p, b_p]
        prev_p = fo_p
    out_p = prev_p

    # ---- batch tile selection ------------------------------------------------
    pack = _SUBLANE_BF16 if weight_dtype == jnp.bfloat16 else _SUBLANE_F32
    if tile_b is None:
        tile_b = 1024                     # large tiles ~85% HBM roofline (v5e/v6e)
    # target >= 4 grid steps when B permits (v7x megacore needs grid >= 2)
    tile_b = min(int(tile_b), max(pl.cdiv(B, 4), pack))
    tile_b = _round_up(max(tile_b, pack), pack)

    widths = [in_dim] + [p.shape[1] for p in padded_params[::2]]
    max_w = max(widths)

    def _act_budget(tb):
        act = 2 * tb * (in_dim + out_p) * 4          # double-buffered x/out tiles
        inter = 3 * tb * max_w * 4                   # per-layer h temps + bf16 cast
        return act + inter

    param_shapes = [p.shape for p in padded_params]
    param_specs, buf_factor = _make_param_specs(param_shapes)
    param_bytes_single = sum(int(p.size) * p.dtype.itemsize for p in padded_params)
    param_bytes = buf_factor * param_bytes_single

    cap = _vmem_cap_bytes()
    while _act_budget(tile_b) + param_bytes + (2 << 20) > cap and tile_b > pack:
        tile_b = _round_up(max(tile_b // 2, pack), pack)
    need = _act_budget(tile_b) + param_bytes + (2 << 20)
    vmem_bytes = int(min(cap, max(need, 16 << 20)))

    grid = (pl.cdiv(B, tile_b),)                     # last block may be partial
    x_spec = pl.BlockSpec((tile_b, in_dim), lambda i: (i, 0))
    out_spec = pl.BlockSpec((tile_b, out_p), lambda i: (i, 0))

    flops = 2 * B * sum(w.shape[0] * w.shape[1] for w in padded_params[::2])
    bytes_accessed = int(x.size) * 4 + param_bytes_single + B * out_p * 4
    cost = pl.CostEstimate(flops=flops, transcendentals=0,
                           bytes_accessed=bytes_accessed)

    kernel = functools.partial(_mlp_kernel, n_layers)

    out_padded = pl.pallas_call(
        kernel,
        out_shape=jax.ShapeDtypeStruct((B, out_p), jnp.float32),
        grid=grid,
        in_specs=[x_spec] + param_specs,
        out_specs=out_spec,
        compiler_params=pltpu.CompilerParams(
            dimension_semantics=("parallel",),       # batch tiles -> v7x 2 TCs
            vmem_limit_bytes=vmem_bytes,
        ),
        cost_estimate=cost,
    )(x, *padded_params)

    if slice_output and out_dim != out_p:
        return out_padded[:, :out_dim]
    return out_padded


def init_branch_net_params(key, input_size, hidden_size, output_size,
                           num_hidden_layers):
    """PyTorch-style U(-1/sqrt(fan_in), 1/sqrt(fan_in)) init, (in, out) weights."""
    dims = ([(input_size, hidden_size)]
            + [(hidden_size, hidden_size)] * (num_hidden_layers - 1)
            + [(hidden_size, output_size)])
    weights, biases = [], []
    for (fan_in, fan_out) in dims:
        key, kw, kb = jax.random.split(key, 3)
        bound = 1.0 / jnp.sqrt(jnp.float32(fan_in))
        w = jax.random.uniform(kw, (fan_in, fan_out), jnp.float32, -bound, bound)
        b = jax.random.uniform(kb, (1, fan_out), jnp.float32, -bound, bound)
        weights.append(w)
        biases.append(b)
    return weights, biases


def branch_net_reference(x, weights, biases):
    """Plain-JAX reference for correctness check."""
    h = x
    for i, (w, b) in enumerate(zip(weights, biases)):
        h = h @ w + b
        if i < len(weights) - 1:
            h = jnp.maximum(h, 0.0)
    return h


if __name__ == "__main__":
    # Small shapes consistent with BranchNet's forward (dense MLP on vectors).
    batch = 19            # not a sublane multiple -> exercises partial last block
    input_size = 16
    hidden_size = 32
    output_size = 8
    num_hidden_layers = 3

    key = jax.random.PRNGKey(0)
    key, kx = jax.random.split(key)
    x = jax.random.normal(kx, (batch, input_size), dtype=jnp.float32)

    weights, biases = init_branch_net_params(
        key, input_size, hidden_size, output_size, num_hidden_layers)

    ref = branch_net_reference(x, weights, biases)

    # Exact path: f32 weights, small tile -> multi-step grid + partial last block.
    out_f32 = branch_net_forward(x, weights, biases, tile_b=8,
                                 weight_dtype=jnp.float32)
    out_f32 = jax.block_until_ready(out_f32)
    assert out_f32.shape == (batch, output_size)
    assert jnp.allclose(out_f32, ref, atol=1e-5, rtol=1e-5), "f32 mismatch"

    # Default fast path: bf16 weights/activations with f32 accumulation.
    out_bf16 = branch_net_forward(x, weights, biases)
    out_bf16 = jax.block_until_ready(out_bf16)
    assert out_bf16.shape == (batch, output_size)
    max_err = float(jnp.max(jnp.abs(out_bf16 - ref)))
    assert max_err < 5e-2, f"bf16 path deviates from f32 reference: {max_err}"

    print("KERNEL_OK")
</pallas_src>

<mosaic_0001>
module attributes {stable_mosaic.version = 11 : i64} {
  func.func @_mlp_kernel(%arg0: i32, %arg1: memref<8x16xf32, #tpu.memory_space<vmem>>, %arg2: memref<16x128xf32, #tpu.memory_space<vmem>>, %arg3: memref<1x128xf32, #tpu.memory_space<vmem>>, %arg4: memref<128x128xf32, #tpu.memory_space<vmem>>, %arg5: memref<1x128xf32, #tpu.memory_space<vmem>>, %arg6: memref<128x128xf32, #tpu.memory_space<vmem>>, %arg7: memref<1x128xf32, #tpu.memory_space<vmem>>, %arg8: memref<128x128xf32, #tpu.memory_space<vmem>>, %arg9: memref<1x128xf32, #tpu.memory_space<vmem>>, %arg10: memref<8x128xf32, #tpu.memory_space<vmem>>) attributes {dimension_semantics = [#tpu.dimension_semantics<parallel>], iteration_bounds = array<i64: 3>, scalar_prefetch = 0 : i64, scratch_operands = 0 : i64, tpu.core_type = #tpu.core_type<tc>, window_params = [{transform_indices = @transform_0, window_bounds = array<i64: 8, 16>}, {pipeline_mode = #tpu.pipeline_mode<synchronous>, transform_indices = @transform_1, window_bounds = array<i64: 16, 128>}, {pipeline_mode = #tpu.pipeline_mode<synchronous>, transform_indices = @transform_2, window_bounds = array<i64: 1, 128>}, {pipeline_mode = #tpu.pipeline_mode<synchronous>, transform_indices = @transform_3, window_bounds = array<i64: 128, 128>}, {pipeline_mode = #tpu.pipeline_mode<synchronous>, transform_indices = @transform_4, window_bounds = array<i64: 1, 128>}, {pipeline_mode = #tpu.pipeline_mode<synchronous>, transform_indices = @transform_5, window_bounds = array<i64: 128, 128>}, {pipeline_mode = #tpu.pipeline_mode<synchronous>, transform_indices = @transform_6, window_bounds = array<i64: 1, 128>}, {pipeline_mode = #tpu.pipeline_mode<synchronous>, transform_indices = @transform_7, window_bounds = array<i64: 128, 128>}, {pipeline_mode = #tpu.pipeline_mode<synchronous>, transform_indices = @transform_8, window_bounds = array<i64: 1, 128>}, {transform_indices = @transform_9, window_bounds = array<i64: 8, 128>}]} {
    %c0 = arith.constant 0 : index
    %c0_0 = arith.constant 0 : index
    %0 = vector.load %arg1[%c0, %c0_0] : memref<8x16xf32, #tpu.memory_space<vmem>>, vector<8x16xf32>
    %c0_1 = arith.constant 0 : index
    %c0_2 = arith.constant 0 : index
    %1 = vector.load %arg2[%c0_1, %c0_2] : memref<16x128xf32, #tpu.memory_space<vmem>>, vector<16x128xf32>
    %c0_3 = arith.constant 0 : index
    %c0_4 = arith.constant 0 : index
    %2 = vector.load %arg3[%c0_3, %c0_4] : memref<1x128xf32, #tpu.memory_space<vmem>>, vector<1x128xf32>
    %cst = arith.constant dense<0.000000e+00> : vector<8x128xf32>
    %3 = tpu.matmul %0, %1, %cst {dimension_numbers = #tpu.dot_dimension_numbers<[1], [0], [0], [1], [0, 0, 1, 1], [], []>} : vector<8x16xf32>, vector<16x128xf32>, vector<8x128xf32> -> vector<8x128xf32>
    %4 = vector.broadcast %2 : vector<1x128xf32> to vector<8x128xf32>
    %5 = arith.addf %3, %4 : vector<8x128xf32>
    %cst_5 = arith.constant 0.000000e+00 : f32
    %6 = vector.broadcast %cst_5 : f32 to vector<8x128xf32>
    %7 = arith.maximumf %5, %6 : vector<8x128xf32>
    %c0_6 = arith.constant 0 : index
    %c0_7 = arith.constant 0 : index
    %8 = vector.load %arg4[%c0_6, %c0_7] : memref<128x128xf32, #tpu.memory_space<vmem>>, vector<128x128xf32>
    %c0_8 = arith.constant 0 : index
    %c0_9 = arith.constant 0 : index
    %9 = vector.load %arg5[%c0_8, %c0_9] : memref<1x128xf32, #tpu.memory_space<vmem>>, vector<1x128xf32>
    %cst_10 = arith.constant dense<0.000000e+00> : vector<8x128xf32>
    %10 = tpu.matmul %7, %8, %cst_10 {dimension_numbers = #tpu.dot_dimension_numbers<[1], [0], [0], [1], [0, 0, 1, 1], [], []>} : vector<8x128xf32>, vector<128x128xf32>, vector<8x128xf32> -> vector<8x128xf32>
    %11 = vector.broadcast %9 : vector<1x128xf32> to vector<8x128xf32>
    %12 = arith.addf %10, %11 : vector<8x128xf32>
    %cst_11 = arith.constant 0.000000e+00 : f32
    %13 = vector.broadcast %cst_11 : f32 to vector<8x128xf32>
    %14 = arith.maximumf %12, %13 : vector<8x128xf32>
    %c0_12 = arith.constant 0 : index
    %c0_13 = arith.constant 0 : index
    %15 = vector.load %arg6[%c0_12, %c0_13] : memref<128x128xf32, #tpu.memory_space<vmem>>, vector<128x128xf32>
    %c0_14 = arith.constant 0 : index
    %c0_15 = arith.constant 0 : index
    %16 = vector.load %arg7[%c0_14, %c0_15] : memref<1x128xf32, #tpu.memory_space<vmem>>, vector<1x128xf32>
    %cst_16 = arith.constant dense<0.000000e+00> : vector<8x128xf32>
    %17 = tpu.matmul %14, %15, %cst_16 {dimension_numbers = #tpu.dot_dimension_numbers<[1], [0], [0], [1], [0, 0, 1, 1], [], []>} : vector<8x128xf32>, vector<128x128xf32>, vector<8x128xf32> -> vector<8x128xf32>
    %18 = vector.broadcast %16 : vector<1x128xf32> to vector<8x128xf32>
    %19 = arith.addf %17, %18 : vector<8x128xf32>
    %cst_17 = arith.constant 0.000000e+00 : f32
    %20 = vector.broadcast %cst_17 : f32 to vector<8x128xf32>
    %21 = arith.maximumf %19, %20 : vector<8x128xf32>
    %c0_18 = arith.constant 0 : index
    %c0_19 = arith.constant 0 : index
    %22 = vector.load %arg8[%c0_18, %c0_19] : memref<128x128xf32, #tpu.memory_space<vmem>>, vector<128x128xf32>
    %c0_20 = arith.constant 0 : index
    %c0_21 = arith.constant 0 : index
    %23 = vector.load %arg9[%c0_20, %c0_21] : memref<1x128xf32, #tpu.memory_space<vmem>>, vector<1x128xf32>
    %cst_22 = arith.constant dense<0.000000e+00> : vector<8x128xf32>
    %24 = tpu.matmul %21, %22, %cst_22 {dimension_numbers = #tpu.dot_dimension_numbers<[1], [0], [0], [1], [0, 0, 1, 1], [], []>} : vector<8x128xf32>, vector<128x128xf32>, vector<8x128xf32> -> vector<8x128xf32>
    %25 = vector.broadcast %23 : vector<1x128xf32> to vector<8x128xf32>
    %26 = arith.addf %24, %25 : vector<8x128xf32>
    %c0_23 = arith.constant 0 : index
    %c0_24 = arith.constant 0 : index
    %27 = vector.load %arg10[%c0_23, %c0_24] : memref<8x128xf32, #tpu.memory_space<vmem>>, vector<8x128xf32>
    tpu.vector_store %arg10[%c0_23, %c0_24], %26 {strides = array<i32>} : memref<8x128xf32, #tpu.memory_space<vmem>>, vector<8x128xf32>,
    return
  }
  func.func @transform_0(%arg0: i32) -> (i32, i32) {
    %c0_i32 = arith.constant 0 : i32
    %c0_i32_0 = arith.constant 0 : i32
    return %arg0, %c0_i32 : i32, i32
  }
  func.func @transform_1(%arg0: i32) -> (i32, i32) {
    %c0_i32 = arith.constant 0 : i32
    %c0_i32_0 = arith.constant 0 : i32
    %c0_i32_1 = arith.constant 0 : i32
    return %c0_i32, %c0_i32_0 : i32, i32
  }
  func.func @transform_2(%arg0: i32) -> (i32, i32) {
    %c0_i32 = arith.constant 0 : i32
    %c0_i32_0 = arith.constant 0 : i32
    %c0_i32_1 = arith.constant 0 : i32
    return %c0_i32, %c0_i32_0 : i32, i32
  }
  func.func @transform_3(%arg0: i32) -> (i32, i32) {
    %c0_i32 = arith.constant 0 : i32
    %c0_i32_0 = arith.constant 0 : i32
    %c0_i32_1 = arith.constant 0 : i32
    return %c0_i32, %c0_i32_0 : i32, i32
  }
  func.func @transform_4(%arg0: i32) -> (i32, i32) {
    %c0_i32 = arith.constant 0 : i32
    %c0_i32_0 = arith.constant 0 : i32
    %c0_i32_1 = arith.constant 0 : i32
    return %c0_i32, %c0_i32_0 : i32, i32
  }
  func.func @transform_5(%arg0: i32) -> (i32, i32) {
    %c0_i32 = arith.constant 0 : i32
    %c0_i32_0 = arith.constant 0 : i32
    %c0_i32_1 = arith.constant 0 : i32
    return %c0_i32, %c0_i32_0 : i32, i32
  }
  func.func @transform_6(%arg0: i32) -> (i32, i32) {
    %c0_i32 = arith.constant 0 : i32
    %c0_i32_0 = arith.constant 0 : i32
    %c0_i32_1 = arith.constant 0 : i32
    return %c0_i32, %c0_i32_0 : i32, i32
  }
  func.func @transform_7(%arg0: i32) -> (i32, i32) {
    %c0_i32 = arith.constant 0 : i32
    %c0_i32_0 = arith.constant 0 : i32
    %c0_i32_1 = arith.constant 0 : i32
    return %c0_i32, %c0_i32_0 : i32, i32
  }
  func.func @transform_8(%arg0: i32) -> (i32, i32) {
    %c0_i32 = arith.constant 0 : i32
    %c0_i32_0 = arith.constant 0 : i32
    %c0_i32_1 = arith.constant 0 : i32
    return %c0_i32, %c0_i32_0 : i32, i32
  }
  func.func @transform_9(%arg0: i32) -> (i32, i32) {
    %c0_i32 = arith.constant 0 : i32
    %c0_i32_0 = arith.constant 0 : i32
    return %arg0, %c0_i32 : i32, i32
  }
}

</mosaic_0001>

<llo_original>
// kernel: tpu_custom_call.1
$region0: #{tpu_custom_call.1}
  #allocation0 [shape = 'u32[]', space=smem, size = 0x4, offset = 0x4, fixed_abs, tag = 'smem constant byte address 0x4 - core index']
  #allocation1 [shape = 'u32[144,128]{1,0:T(1,128)}', space=vmem, size = 0x12000, scoped, tag = 'internal scratch']
  %s0 = inlined_call_operand.vmem [shape: f32[19,16], index: 0, kind: input, shape index: {}]
  %s1 = inlined_call_operand.vmem [shape: f32[16,128], index: 1, kind: input, shape index: {}]
  %s2 = inlined_call_operand.vmem [shape: f32[1,128], index: 2, kind: input, shape index: {}]
  %s3 = inlined_call_operand.hbm [shape: f32[128,128], index: 3, kind: input, shape index: {}]
  %s4 = inlined_call_operand.vmem [shape: f32[1,128], index: 4, kind: input, shape index: {}]
  %s5 = inlined_call_operand.hbm [shape: f32[128,128], index: 5, kind: input, shape index: {}]
  %s6 = inlined_call_operand.vmem [shape: f32[1,128], index: 6, kind: input, shape index: {}]
  %s7 = inlined_call_operand.hbm [shape: f32[128,128], index: 7, kind: input, shape index: {}]
  %s8 = inlined_call_operand.vmem [shape: f32[1,128], index: 8, kind: input, shape index: {}]
  %s9 = inlined_call_operand.hbm [shape: f32[19,128], index: 9, kind: output, shape index: {}]
  %s10 = sld [smem:[#allocation0]]
  $region81: #{tpu_custom_call.1} parent=0
    _
  %s12 = ssub.s32 1, %s10
  %s13 = scalar_select 0, %s12, %s10
  $region1: #{tpu_custom_call.1} parent=0
    #allocation2 [shape = 'u8[65536]{0}', space=vmem, size = 0x10000, scoped, tag = 'input window, operand 3, single buffered']
    #allocation3 [shape = 's32[2]{0}', space=sflag, size = 0x8, scoped, tag = 'scoped memory for tpu_custom_call.1']
    #allocation4 [shape = 's32[2]{0}', space=sflag, size = 0x8, scoped, tag = 'scoped memory for tpu_custom_call.1']
    #allocation5 [shape = 'u8[65536]{0}', space=vmem, size = 0x10000, scoped, tag = 'input window, operand 5, single buffered']
    #allocation6 [shape = 's32[1]{0}', space=sflag, size = 0x4, scoped, tag = 'scoped memory for tpu_custom_call.1']
    #allocation7 [shape = 'u8[65536]{0}', space=vmem, size = 0x10000, scoped, tag = 'input window, operand 7, single buffered']
    #allocation8 [shape = 'u8[8192]{0}', space=vmem, size = 0x2000, scoped, tag = 'output window, operand 0']
    %14 = vsyncpa [#allocation3], 0
    %15 = vsyncpa [#allocation6], 0
    %16 = vsyncpa [#allocation4], 0
    %s17 = scalar_lea.sflag [#allocation4], 1
    %18 = vsyncpa %s17, 0
    loop: start=0, step=1, limit=5
    $region2: #{tpu_custom_call.1} parent=1 // loop_pre_header
      _
    $region3: #{tpu_custom_call.1} parent=1 // loop_header
      %s20 = sphi 0, %s24
      %p21 = scmp.ge.s32.totalorder %s20, 5
      %s30 = sphi 0, %s32
      %s33 = sphi 0, %s30
      %s34 = sphi 0, %s33
      %s50 = sphi 0, %s34
      %s54 = sphi 0, %s54
      %s56 = sphi 0, %s54
      %s57 = sphi 0, %s56
      %s71 = sphi 0, %s57
      %s75 = sphi 0, %s75
      %s77 = sphi 0, %s75
      %s78 = sphi 0, %s77
      %s92 = sphi 0, %s78
      %s96 = sphi 0, %s96
      %s98 = sphi 0, %s96
      %s99 = sphi 0, %s98
      %s113 = sphi 0, %s99
      %s117 = sphi 0, %s117
      %s119 = sphi 0, %s117
      %s120 = sphi 0, %s119
      %s134 = sphi 0, %s120
      %s138 = sphi 0, %s138
      %s140 = sphi 0, %s138
      %s141 = sphi 0, %s140
      %s155 = sphi 0, %s141
      %s159 = sphi 0, %s159
      %s161 = sphi 0, %s159
      %s162 = sphi 0, %s161
      %s176 = sphi 0, %s162
      %s180 = sphi 0, %s180
      %s182 = sphi 0, %s180
      %s183 = sphi 0, %s182
      %s197 = sphi 0, %s183
      %s201 = sphi 0, %s201
      %s203 = sphi 0, %s201
      %s204 = sphi 0, %s203
      %s218 = sphi 0, %s204
      %s224 = sphi 0, %s226
      %s227 = sphi 0, %s224
      %s228 = sphi 0, %s227
      %s244 = sphi 0, %s228
    $region4: #{tpu_custom_call.1} parent=1 // loop_header_branch
      %23 = sbr.rel (%p21) target = $region8
    $region5: #{tpu_custom_call.1} parent=1 // loop_body
      %s25 = ssub.s32 %s20, 1
      %s26 = ssub.s32 %s20, 2
      %s27 = sadd.s32 %s20, 1
      %s28 = ssub.s32 %s20, %s27
      %p29 = scmp.eq.s32.totalorder %s28, 0
      %s31 = sadd.s32 %s30, 1
      %s32 = scalar_select %p29, %s30, %s31
      %p35 = pneg %p29
      %p36 = scmp.eq.s32.totalorder %s20, 2
      %p37 = por %p35, %p36
      %p38 = scmp.ne.s32.totalorder %s30, %s33
      %p39 = scmp.eq.s32.totalorder %s20, 0
      %p40 = por %p38, %p39
      %p41 = scmp.ne.s32.totalorder %s30, %s33
      %p42 = scmp.eq.s32.totalorder %s25, 2
      %p43 = por %p41, %p42
      %p44 = scmp.ne.s32.totalorder %s33, %s34
      %p45 = scmp.eq.s32.totalorder %s25, 0
      %p46 = por %p44, %p45
      %p47 = scmp.ne.s32.totalorder %s33, %s34
      %p48 = scmp.eq.s32.totalorder %s26, 2
      %p49 = por %p47, %p48
      %p51 = scmp.ne.s32.totalorder %s34, %s50
      %p52 = scmp.eq.s32.totalorder %s26, 0
      %p53 = por %p51, %p52
      %s55 = sadd.s32 %s54, 1
      %p58 = scmp.eq.s32.totalorder %s20, 2
      %p59 = scmp.ne.s32.totalorder %s54, %s56
      %p60 = scmp.eq.s32.totalorder %s20, 0
      %p61 = por %p59, %p60
      %p62 = scmp.ne.s32.totalorder %s54, %s56
      %p63 = scmp.eq.s32.totalorder %s25, 2
      %p64 = por %p62, %p63
      %p65 = scmp.ne.s32.totalorder %s56, %s57
      %p66 = scmp.eq.s32.totalorder %s25, 0
      %p67 = por %p65, %p66
      %p68 = scmp.ne.s32.totalorder %s56, %s57
      %p69 = scmp.eq.s32.totalorder %s26, 2
      %p70 = por %p68, %p69
      %p72 = scmp.ne.s32.totalorder %s57, %s71
      %p73 = scmp.eq.s32.totalorder %s26, 0
      %p74 = por %p72, %p73
      %s76 = sadd.s32 %s75, 1
      %p79 = scmp.eq.s32.totalorder %s20, 2
      %p80 = scmp.ne.s32.totalorder %s75, %s77
      %p81 = scmp.eq.s32.totalorder %s20, 0
      %p82 = por %p80, %p81
      %p83 = scmp.ne.s32.totalorder %s75, %s77
      %p84 = scmp.eq.s32.totalorder %s25, 2
      %p85 = por %p83, %p84
      %p86 = scmp.ne.s32.totalorder %s77, %s78
      %p87 = scmp.eq.s32.totalorder %s25, 0
      %p88 = por %p86, %p87
      %p89 = scmp.ne.s32.totalorder %s77, %s78
      %p90 = scmp.eq.s32.totalorder %s26, 2
      %p91 = por %p89, %p90
      %p93 = scmp.ne.s32.totalorder %s78, %s92
      %p94 = scmp.eq.s32.totalorder %s26, 0
      %p95 = por %p93, %p94
      %s97 = sadd.s32 %s96, 1
      %p100 = scmp.eq.s32.totalorder %s20, 2
      %p101 = scmp.ne.s32.totalorder %s96, %s98
      %p102 = scmp.eq.s32.totalorder %s20, 0
      %p103 = por %p101, %p102
      %p104 = scmp.ne.s32.totalorder %s96, %s98
      %p105 = scmp.eq.s32.totalorder %s25, 2
      %p106 = por %p104, %p105
      %p107 = scmp.ne.s32.totalorder %s98, %s99
      %p108 = scmp.eq.s32.totalorder %s25, 0
      %p109 = por %p107, %p108
      %p110 = scmp.ne.s32.totalorder %s98, %s99
      %p111 = scmp.eq.s32.totalorder %s26, 2
      %p112 = por %p110, %p111
      %p114 = scmp.ne.s32.totalorder %s99, %s113
      %p115 = scmp.eq.s32.totalorder %s26, 0
      %p116 = por %p114, %p115
      %s118 = sadd.s32 %s117, 1
      %p121 = scmp.eq.s32.totalorder %s20, 2
      %p122 = scmp.ne.s32.totalorder %s117, %s119
      %p123 = scmp.eq.s32.totalorder %s20, 0
      %p124 = por %p122, %p123
      %p125 = scmp.ne.s32.totalorder %s117, %s119
      %p126 = scmp.eq.s32.totalorder %s25, 2
      %p127 = por %p125, %p126
      %p128 = scmp.ne.s32.totalorder %s119, %s120
      %p129 = scmp.eq.s32.totalorder %s25, 0
      %p130 = por %p128, %p129
      %p131 = scmp.ne.s32.totalorder %s119, %s120
      %p132 = scmp.eq.s32.totalorder %s26, 2
      %p133 = por %p131, %p132
      %p135 = scmp.ne.s32.totalorder %s120, %s134
      %p136 = scmp.eq.s32.totalorder %s26, 0
      %p137 = por %p135, %p136
      %s139 = sadd.s32 %s138, 1
      %p142 = scmp.eq.s32.totalorder %s20, 2
      %p143 = scmp.ne.s32.totalorder %s138, %s140
      %p144 = scmp.eq.s32.totalorder %s20, 0
      %p145 = por %p143, %p144
      %p146 = scmp.ne.s32.totalorder %s138, %s140
      %p147 = scmp.eq.s32.totalorder %s25, 2
      %p148 = por %p146, %p147
      %p149 = scmp.ne.s32.totalorder %s140, %s141
      %p150 = scmp.eq.s32.totalorder %s25, 0
      %p151 = por %p149, %p150
      %p152 = scmp.ne.s32.totalorder %s140, %s141
      %p153 = scmp.eq.s32.totalorder %s26, 2
      %p154 = por %p152, %p153
      %p156 = scmp.ne.s32.totalorder %s141, %s155
      %p157 = scmp.eq.s32.totalorder %s26, 0
      %p158 = por %p156, %p157
      %s160 = sadd.s32 %s159, 1
      %p163 = scmp.eq.s32.totalorder %s20, 2
      %p164 = scmp.ne.s32.totalorder %s159, %s161
      %p165 = scmp.eq.s32.totalorder %s20, 0
      %p166 = por %p164, %p165
      %p167 = scmp.ne.s32.totalorder %s159, %s161
      %p168 = scmp.eq.s32.totalorder %s25, 2
      %p169 = por %p167, %p168
      %p170 = scmp.ne.s32.totalorder %s161, %s162
      %p171 = scmp.eq.s32.totalorder %s25, 0
      %p172 = por %p170, %p171
      %p173 = scmp.ne.s32.totalorder %s161, %s162
      %p174 = scmp.eq.s32.totalorder %s26, 2
      %p175 = por %p173, %p174
      %p177 = scmp.ne.s32.totalorder %s162, %s176
      %p178 = scmp.eq.s32.totalorder %s26, 0
      %p179 = por %p177, %p178
      %s181 = sadd.s32 %s180, 1
      %p184 = scmp.eq.s32.totalorder %s20, 2
      %p185 = scmp.ne.s32.totalorder %s180, %s182
      %p186 = scmp.eq.s32.totalorder %s20, 0
      %p187 = por %p185, %p186
      %p188 = scmp.ne.s32.totalorder %s180, %s182
      %p189 = scmp.eq.s32.totalorder %s25, 2
      %p190 = por %p188, %p189
      %p191 = scmp.ne.s32.totalorder %s182, %s183
      %p192 = scmp.eq.s32.totalorder %s25, 0
      %p193 = por %p191, %p192
      %p194 = scmp.ne.s32.totalorder %s182, %s183
      %p195 = scmp.eq.s32.totalorder %s26, 2
      %p196 = por %p194, %p195
      %p198 = scmp.ne.s32.totalorder %s183, %s197
      %p199 = scmp.eq.s32.totalorder %s26, 0
      %p200 = por %p198, %p199
      %s202 = sadd.s32 %s201, 1
      %p205 = scmp.eq.s32.totalorder %s20, 2
      %p206 = scmp.ne.s32.totalorder %s201, %s203
      %p207 = scmp.eq.s32.totalorder %s20, 0
      %p208 = por %p206, %p207
      %p209 = scmp.ne.s32.totalorder %s201, %s203
      %p210 = scmp.eq.s32.totalorder %s25, 2
      %p211 = por %p209, %p210
      %p212 = scmp.ne.s32.totalorder %s203, %s204
      %p213 = scmp.eq.s32.totalorder %s25, 0
      %p214 = por %p212, %p213
      %p215 = scmp.ne.s32.totalorder %s203, %s204
      %p216 = scmp.eq.s32.totalorder %s26, 2
      %p217 = por %p215, %p216
      %p219 = scmp.ne.s32.totalorder %s204, %s218
      %p220 = scmp.eq.s32.totalorder %s26, 0
      %p221 = por %p219, %p220
      %s222 = ssub.s32 %s20, %s27
      %p223 = scmp.eq.s32.totalorder %s222, 0
      %s225 = sadd.s32 %s224, 1
      %s226 = scalar_select %p223, %s224, %s225
      %p229 = pneg %p223
      %p230 = scmp.eq.s32.totalorder %s20, 2
      %p231 = por %p229, %p230
      %p232 = scmp.ne.s32.totalorder %s224, %s227
      %p233 = scmp.eq.s32.totalorder %s20, 0
      %p234 = por %p232, %p233
      %p235 = scmp.ne.s32.totalorder %s224, %s227
      %p236 = scmp.eq.s32.totalorder %s25, 2
      %p237 = por %p235, %p236
      %p238 = scmp.ne.s32.totalorder %s227, %s228
      %p239 = scmp.eq.s32.totalorder %s25, 0
      %p240 = por %p238, %p239
      %p241 = scmp.ne.s32.totalorder %s227, %s228
      %p242 = scmp.eq.s32.totalorder %s26, 2
      %p243 = por %p241, %p242
      %p245 = scmp.ne.s32.totalorder %s228, %s244
      %p246 = scmp.eq.s32.totalorder %s26, 0
      %p247 = por %p245, %p246
      %p248 = scmp.le.s32.totalorder 1, %s20
      %p249 = scmp.lt.s32.totalorder %s20, 4
      %p250 = pnand %p248, %p249
      %p251 = pneg %p250
      // Predicated region
      $region9: #{tpu_custom_call.1} parent=5 // pred_check
        _
      $region10: #{tpu_custom_call.1} parent=5 // pred_check_branch
        %253 = sbr.rel (%p250) target = $region12
      $region11: #{tpu_custom_call.1} parent=5 // pred_region
        %s254 = ssub.s32 %s20, 1
        // Predicated region
        $region13: #{tpu_custom_call.1} parent=11 // pred_check
          %p255 = pneg %p67
        $region14: #{tpu_custom_call.1} parent=11 // pred_check_branch
          %257 = sbr.rel (%p255) target = $region16
        $region15: #{tpu_custom_call.1} parent=11 // pred_region
          _
        $region16: #{tpu_custom_call.1} parent=11 // pred_fallthru
          _
        // Predicated region
        $region17: #{tpu_custom_call.1} parent=11 // pred_check
          %p258 = pneg %p88
        $region18: #{tpu_custom_call.1} parent=11 // pred_check_branch
          %260 = sbr.rel (%p258) target = $region20
        $region19: #{tpu_custom_call.1} parent=11 // pred_region
          _
        $region20: #{tpu_custom_call.1} parent=11 // pred_fallthru
          _
        // Predicated region
        $region21: #{tpu_custom_call.1} parent=11 // pred_check
          %p261 = pneg %p109
        $region22: #{tpu_custom_call.1} parent=11 // pred_check_branch
          %263 = sbr.rel (%p261) target = $region24
        $region23: #{tpu_custom_call.1} parent=11 // pred_region
          %s265 = ssub.s32 2048, 2048
          %266 = vsyncadd [#allocation3], %s265
          %s267 = sshll.u32 [#allocation2], 4
          %s268 = int_to_ptr.vmem [resolvable:$true] %s267
          %273 = dma.hbm_to_vmem [thread:$0]  %s3, 2048, %s268, [#allocation3], 128, 128, 8
        $region24: #{tpu_custom_call.1} parent=11 // pred_fallthru
          _
        // Predicated region
        $region25: #{tpu_custom_call.1} parent=11 // pred_check
          %p274 = pneg %p130
        $region26: #{tpu_custom_call.1} parent=11 // pred_check_branch
          %276 = sbr.rel (%p274) target = $region28
        $region27: #{tpu_custom_call.1} parent=11 // pred_region
          _
        $region28: #{tpu_custom_call.1} parent=11 // pred_fallthru
          _
        // Predicated region
        $region29: #{tpu_custom_call.1} parent=11 // pred_check
          %p277 = pneg %p151
        $region30: #{tpu_custom_call.1} parent=11 // pred_check_branch
          %279 = sbr.rel (%p277) target = $region32
        $region31: #{tpu_custom_call.1} parent=11 // pred_region
          %s281 = ssub.s32 2048, 2048
          %282 = vsyncadd [#allocation6], %s281
          %s283 = sshll.u32 [#allocation5], 4
          %s284 = int_to_ptr.vmem [resolvable:$true] %s283
          %289 = dma.hbm_to_vmem [thread:$0]  %s5, 2048, %s284, [#allocation6], 128, 128, 8
        $region32: #{tpu_custom_call.1} parent=11 // pred_fallthru
          _
        // Predicated region
        $region33: #{tpu_custom_call.1} parent=11 // pred_check
          %p290 = pneg %p172
        $region34: #{tpu_custom_call.1} parent=11 // pred_check_branch
          %292 = sbr.rel (%p290) target = $region36
        $region35: #{tpu_custom_call.1} parent=11 // pred_region
          _
        $region36: #{tpu_custom_call.1} parent=11 // pred_fallthru
          _
        // Predicated region
        $region37: #{tpu_custom_call.1} parent=11 // pred_check
          %p293 = pneg %p193
        $region38: #{tpu_custom_call.1} parent=11 // pred_check_branch
          %295 = sbr.rel (%p293) target = $region40
        $region39: #{tpu_custom_call.1} parent=11 // pred_region
          %s297 = ssub.s32 2048, 2048
          %298 = vsyncadd [#allocation6], %s297
          %s299 = sshll.u32 [#allocation7], 4
          %s300 = int_to_ptr.vmem [resolvable:$true] %s299
          %305 = dma.hbm_to_vmem [thread:$0]  %s7, 2048, %s300, [#allocation6], 128, 128, 8
        $region40: #{tpu_custom_call.1} parent=11 // pred_fallthru
          _
        // Predicated region
        $region41: #{tpu_custom_call.1} parent=11 // pred_check
          %p306 = pneg %p214
        $region42: #{tpu_custom_call.1} parent=11 // pred_check_branch
          %308 = sbr.rel (%p306) target = $region44
        $region43: #{tpu_custom_call.1} parent=11 // pred_region
          _
        $region44: #{tpu_custom_call.1} parent=11 // pred_fallthru
          _
      $region12: #{tpu_custom_call.1} parent=5 // pred_fallthru
        _
      %p309 = scmp.lt.s32.totalorder %s20, 3
      // Predicated region
      $region45: #{tpu_custom_call.1} parent=5 // pred_check
        %p310 = pneg %p309
      $region46: #{tpu_custom_call.1} parent=5 // pred_check_branch
        %312 = sbr.rel (%p310) target = $region48
      $region47: #{tpu_custom_call.1} parent=5 // pred_region
        // Predicated region
        $region49: #{tpu_custom_call.1} parent=47 // pred_check
          %p313 = pneg %p40
        $region50: #{tpu_custom_call.1} parent=47 // pred_check_branch
          %315 = sbr.rel (%p313) target = $region52
        $region51: #{tpu_custom_call.1} parent=47 // pred_region
          %p316 = scmp.lt.s32.totalorder %s20, 2
          %s317 = scalar_select %p316, %s20, 2
          %s318 = smul.addr %s317, 8
          %s319 = scalar_lea.vmem %s0, %s318
        $region52: #{tpu_custom_call.1} parent=47 // pred_fallthru
          _
      $region48: #{tpu_custom_call.1} parent=5 // pred_fallthru
        _
      %p320 = scmp.le.s32.totalorder 1, %s20
      %p321 = scmp.lt.s32.totalorder %s20, 4
      %p322 = pnand %p320, %p321
      %p323 = pneg %p322
      // Predicated region
      $region53: #{tpu_custom_call.1} parent=5 // pred_check
        _
      $region54: #{tpu_custom_call.1} parent=5 // pred_check_branch
        %325 = sbr.rel (%p322) target = $region56
      $region55: #{tpu_custom_call.1} parent=5 // pred_region
        %s326 = ssub.s32 %s20, 1
        // Predicated region
        $region57: #{tpu_custom_call.1} parent=55 // pred_check
          %p327 = pneg %p109
        $region58: #{tpu_custom_call.1} parent=55 // pred_check_branch
          %329 = sbr.rel (%p327) target = $region60
        $region59: #{tpu_custom_call.1} parent=55 // pred_region
          %330 = dma.done [#allocation3], 2048
        $region60: #{tpu_custom_call.1} parent=55 // pred_fallthru
          _
        // Predicated region
        $region61: #{tpu_custom_call.1} parent=55 // pred_check
          %p331 = pneg %p151
        $region62: #{tpu_custom_call.1} parent=55 // pred_check_branch
          %333 = sbr.rel (%p331) target = $region64
        $region63: #{tpu_custom_call.1} parent=55 // pred_region
          %334 = dma.done [#allocation6], 2048
        $region64: #{tpu_custom_call.1} parent=55 // pred_fallthru
          _
        // Predicated region
        $region65: #{tpu_custom_call.1} parent=55 // pred_check
          %p335 = pneg %p193
        $region66: #{tpu_custom_call.1} parent=55 // pred_check_branch
          %337 = sbr.rel (%p335) target = $region68
        $region67: #{tpu_custom_call.1} parent=55 // pred_region
          %338 = dma.done [#allocation6], 2048
        $region68: #{tpu_custom_call.1} parent=55 // pred_fallthru
          _
        %p339 = scmp.lt.s32.totalorder %s25, 2
        %s340 = scalar_select %p339, %s25, 2
        %s341 = smul.addr %s340, 8
        %s342 = scalar_lea.vmem %s0, %s341
        %p343 = pneg %p46
        %p344 = pneg %p43
        %p345 = pneg %p67
        %p346 = pneg %p64
        %p347 = pneg %p88
        %p348 = pneg %p85
        %p349 = pneg %p109
        %p350 = pneg %p106
        %p351 = pneg %p130
        %p352 = pneg %p127
        %p353 = pneg %p151
        %p354 = pneg %p148
        %p355 = pneg %p172
        %p356 = pneg %p169
        %p357 = pneg %p193
        %p358 = pneg %p190
        %p359 = pneg %p214
        %p360 = pneg %p211
        %p361 = pneg %p240
        %p362 = pneg %p237
        %s363 = sand.u32 %s227, 1
        %s364 = scalar_lea.sflag [#allocation4], %s363
        %s365 = sand.u32 %s227, 1
        %s366 = smul.addr %s365, 8
        %s367 = scalar_lea.vmem [#allocation8], %s366
        %p368 = scmp.lt.s32.totalorder %s25, 2
        %s369 = scalar_select %p368, %s25, 2
        %s370 = smul.addr %s369, 8
        %s371 = scalar_lea.vmem %s0, %s370
        %v372 = vld [vmem:[%s371] sm:$0xff]
        %v373 = vld [vmem:[%s1] sm:$0xff]
        %v374 = vld [vmem:[%s1 + $0x8] sm:$0xff]
        %v375 = vld [vmem:[%s2] sm:$0x1]
        %v377 = vlaneseq
        %v378 = vshrl.u32 %v377, 7
        %v379 = vsub.s32 0, %v378
        %v380 = vrot.slane %v375, %v379
        %vm382 = vcmask 130048
        %v384 = vsel %vm382, %v372, 0
        %386 = vmatprep.subr.mxu0 0.0
        %387 = vmatpush1.msra.mxu0 0.0
        %388 = vmatprep.subr.mxu0 0.0
        %389 = vmatpush1.msra.mxu0 0.0
        %390 = vmatprep.subr.mxu0 0.0
        %391 = vmatpush1.msra.mxu0 0.0
        %392 = vmatprep.subr.mxu0 0.0
        %393 = vmatpush1.msra.mxu0 0.0
        %394 = vmatprep.subr.mxu0 0.0
        %395 = vmatpush1.msra.mxu0 0.0
        %396 = vmatprep.subr.mxu0 0.0
        %397 = vmatpush1.msra.mxu0 0.0
        %398 = vmatprep.subr.mxu0 0.0
        %399 = vmatpush1.msra.mxu0 0.0
        %400 = vmatprep.subr.mxu0 0.0
        %401 = vmatpush1.msra.mxu0 0.0
        %402 = vmatprep.subr.mxu0 0.0
        %403 = vmatpush1.msra.mxu0 0.0
        %404 = vmatprep.subr.mxu0 0.0
        %405 = vmatpush1.msra.mxu0 0.0
        %406 = vmatprep.subr.mxu0 0.0
        %407 = vmatpush1.msra.mxu0 0.0
        %408 = vmatprep.subr.mxu0 0.0
        %409 = vmatpush1.msra.mxu0 0.0
        %410 = vmatprep.subr.mxu0 0.0
        %411 = vmatpush1.msra.mxu0 0.0
        %412 = vmatprep.subr.mxu0 0.0
        %413 = vmatpush1.msra.mxu0 0.0
        %414 = vmatprep.subr.mxu0 0.0
        %415 = vmatpush1.msra.mxu0 %v374
        %416 = vmatprep.subr.mxu0 0.0
        %417 = vmatpush1.msra.mxu0 %v373
        %418 = vmatprep.subr.mxu0 0.0
        %419 = vmatpush2.msra.mxu0 0.0
        %420 = vmatprep.subr.mxu0 0.0
        %421 = vmatpush2.msra.mxu0 0.0
        %422 = vmatprep.subr.mxu0 0.0
        %423 = vmatpush2.msra.mxu0 0.0
        %424 = vmatprep.subr.mxu0 0.0
        %425 = vmatpush2.msra.mxu0 0.0
        %426 = vmatprep.subr.mxu0 0.0
        %427 = vmatpush2.msra.mxu0 0.0
        %428 = vmatprep.subr.mxu0 0.0
        %429 = vmatpush2.msra.mxu0 0.0
        %430 = vmatprep.subr.mxu0 0.0
        %431 = vmatpush2.msra.mxu0 0.0
        %432 = vmatprep.subr.mxu0 0.0
        %433 = vmatpush2.msra.mxu0 0.0
        %434 = vmatprep.subr.mxu0 0.0
        %435 = vmatpush2.msra.mxu0 0.0
        %436 = vmatprep.subr.mxu0 0.0
        %437 = vmatpush2.msra.mxu0 0.0
        %438 = vmatprep.subr.mxu0 0.0
        %439 = vmatpush2.msra.mxu0 0.0
        %440 = vmatprep.subr.mxu0 0.0
        %441 = vmatpush2.msra.mxu0 0.0
        %442 = vmatprep.subr.mxu0 0.0
        %443 = vmatpush2.msra.mxu0 0.0
        %444 = vmatprep.subr.mxu0 0.0
        %445 = vmatpush2.msra.mxu0 0.0
        %446 = vmatprep.subr.mxu0 0.0
        %447 = vmatpush2.msra.mxu0 0.0
        %448 = vmatprep.subr.mxu0 0.0
        %449 = vmatpush2.msra.mxu0 0.0
        %450 = vmatprep.mubr.f32.mxu0 0.0
        %451 = vmatmul.mubr.f32.gmra.mxu0 %v384
        %v452 = vpop.f32.mrf.mxu0
        %v453 = vadd.f32 %v380, %v452
        %v454 = vpop.f32.mrf.mxu0
        %455 = vdwg.mxu0
        %v456 = vmax.f32 %v453, 0.0
        %v457 = vld [vmem:[#allocation2] sm:$0xff]
        %v458 = vld [vmem:[#allocation2 + $0x8] sm:$0xff]
        %v459 = vld [vmem:[#allocation2 + $0x10] sm:$0xff]
        %v460 = vld [vmem:[#allocation2 + $0x18] sm:$0xff]
        %v461 = vld [vmem:[#allocation2 + $0x20] sm:$0xff]
        %v462 = vld [vmem:[#allocation2 + $0x28] sm:$0xff]
        %v463 = vld [vmem:[#allocation2 + $0x30] sm:$0xff]
        %v464 = vld [vmem:[#allocation2 + $0x38] sm:$0xff]
        %v465 = vld [vmem:[#allocation2 + $0x40] sm:$0xff]
        %v466 = vld [vmem:[#allocation2 + $0x48] sm:$0xff]
        %v467 = vld [vmem:[#allocation2 + $0x50] sm:$0xff]
        %v468 = vld [vmem:[#allocation2 + $0x58] sm:$0xff]
        %v469 = vld [vmem:[#allocation2 + $0x60] sm:$0xff]
        %v470 = vld [vmem:[#allocation2 + $0x68] sm:$0xff]
        %v471 = vld [vmem:[#allocation2 + $0x70] sm:$0xff]
        %v472 = vld [vmem:[#allocation2 + $0x78] sm:$0xff]
        %v473 = vld [vmem:[%s4] sm:$0x1]
        %v475 = vlaneseq
        %v476 = vshrl.u32 %v475, 7
        %v477 = vsub.s32 0, %v476
        %v478 = vrot.slane %v473, %v477
        %480 = vmatprep.subr.mxu0 0.0
        %481 = vmatpush1.msra.mxu0 %v472
        %482 = vmatprep.subr.mxu0 0.0
        %483 = vmatpush1.msra.mxu0 %v471
        %484 = vmatprep.subr.mxu0 0.0
        %485 = vmatpush1.msra.mxu0 %v470
        %486 = vmatprep.subr.mxu0 0.0
        %487 = vmatpush1.msra.mxu0 %v469
        %488 = vmatprep.subr.mxu0 0.0
        %489 = vmatpush1.msra.mxu0 %v468
        %490 = vmatprep.subr.mxu0 0.0
        %491 = vmatpush1.msra.mxu0 %v467
        %492 = vmatprep.subr.mxu0 0.0
        %493 = vmatpush1.msra.mxu0 %v466
        %494 = vmatprep.subr.mxu0 0.0
        %495 = vmatpush1.msra.mxu0 %v465
        %496 = vmatprep.subr.mxu0 0.0
        %497 = vmatpush1.msra.mxu0 %v464
        %498 = vmatprep.subr.mxu0 0.0
        %499 = vmatpush1.msra.mxu0 %v463
        %500 = vmatprep.subr.mxu0 0.0
        %501 = vmatpush1.msra.mxu0 %v462
        %502 = vmatprep.subr.mxu0 0.0
        %503 = vmatpush1.msra.mxu0 %v461
        %504 = vmatprep.subr.mxu0 0.0
        %505 = vmatpush1.msra.mxu0 %v460
        %506 = vmatprep.subr.mxu0 0.0
        %507 = vmatpush1.msra.mxu0 %v459
        %508 = vmatprep.subr.mxu0 0.0
        %509 = vmatpush1.msra.mxu0 %v458
        %510 = vmatprep.subr.mxu0 0.0
        %511 = vmatpush1.msra.mxu0 %v457
        %512 = vmatprep.subr.mxu0 0.0
        %513 = vmatpush2.msra.mxu0 0.0
        %514 = vmatprep.subr.mxu0 0.0
        %515 = vmatpush2.msra.mxu0 0.0
        %516 = vmatprep.subr.mxu0 0.0
        %517 = vmatpush2.msra.mxu0 0.0
        %518 = vmatprep.subr.mxu0 0.0
        %519 = vmatpush2.msra.mxu0 0.0
        %520 = vmatprep.subr.mxu0 0.0
        %521 = vmatpush2.msra.mxu0 0.0
        %522 = vmatprep.subr.mxu0 0.0
        %523 = vmatpush2.msra.mxu0 0.0
        %524 = vmatprep.subr.mxu0 0.0
        %525 = vmatpush2.msra.mxu0 0.0
        %526 = vmatprep.subr.mxu0 0.0
        %527 = vmatpush2.msra.mxu0 0.0
        %528 = vmatprep.subr.mxu0 0.0
        %529 = vmatpush2.msra.mxu0 0.0
        %530 = vmatprep.subr.mxu0 0.0
        %531 = vmatpush2.msra.mxu0 0.0
        %532 = vmatprep.subr.mxu0 0.0
        %533 = vmatpush2.msra.mxu0 0.0
        %534 = vmatprep.subr.mxu0 0.0
        %535 = vmatpush2.msra.mxu0 0.0
        %536 = vmatprep.subr.mxu0 0.0
        %537 = vmatpush2.msra.mxu0 0.0
        %538 = vmatprep.subr.mxu0 0.0
        %539 = vmatpush2.msra.mxu0 0.0
        %540 = vmatprep.subr.mxu0 0.0
        %541 = vmatpush2.msra.mxu0 0.0
        %542 = vmatprep.subr.mxu0 0.0
        %543 = vmatpush2.msra.mxu0 0.0
        %544 = vmatprep.mubr.f32.mxu0 0.0
        %545 = vmatmul.mubr.f32.gmra.mxu0 %v456
        %v546 = vpop.f32.mrf.mxu0
        %v547 = vadd.f32 %v478, %v546
        %v548 = vpop.f32.mrf.mxu0
        %549 = vdwg.mxu0
        %v550 = vmax.f32 %v547, 0.0
        %v551 = vld [vmem:[#allocation5] sm:$0xff]
        %v552 = vld [vmem:[#allocation5 + $0x8] sm:$0xff]
        %v553 = vld [vmem:[#allocation5 + $0x10] sm:$0xff]
        %v554 = vld [vmem:[#allocation5 + $0x18] sm:$0xff]
        %v555 = vld [vmem:[#allocation5 + $0x20] sm:$0xff]
        %v556 = vld [vmem:[#allocation5 + $0x28] sm:$0xff]
        %v557 = vld [vmem:[#allocation5 + $0x30] sm:$0xff]
        %v558 = vld [vmem:[#allocation5 + $0x38] sm:$0xff]
        %v559 = vld [vmem:[#allocation5 + $0x40] sm:$0xff]
        %v560 = vld [vmem:[#allocation5 + $0x48] sm:$0xff]
        %v561 = vld [vmem:[#allocation5 + $0x50] sm:$0xff]
        %v562 = vld [vmem:[#allocation5 + $0x58] sm:$0xff]
        %v563 = vld [vmem:[#allocation5 + $0x60] sm:$0xff]
        %v564 = vld [vmem:[#allocation5 + $0x68] sm:$0xff]
        %v565 = vld [vmem:[#allocation5 + $0x70] sm:$0xff]
        %v566 = vld [vmem:[#allocation5 + $0x78] sm:$0xff]
        %v567 = vld [vmem:[%s6] sm:$0x1]
        %v569 = vlaneseq
        %v570 = vshrl.u32 %v569, 7
        %v571 = vsub.s32 0, %v570
        %v572 = vrot.slane %v567, %v571
        %574 = vmatprep.subr.mxu0 0.0
        %575 = vmatpush1.msra.mxu0 %v566
        %576 = vmatprep.subr.mxu0 0.0
        %577 = vmatpush1.msra.mxu0 %v565
        %578 = vmatprep.subr.mxu0 0.0
        %579 = vmatpush1.msra.mxu0 %v564
        %580 = vmatprep.subr.mxu0 0.0
        %581 = vmatpush1.msra.mxu0 %v563
        %582 = vmatprep.subr.mxu0 0.0
        %583 = vmatpush1.msra.mxu0 %v562
        %584 = vmatprep.subr.mxu0 0.0
        %585 = vmatpush1.msra.mxu0 %v561
        %586 = vmatprep.subr.mxu0 0.0
        %587 = vmatpush1.msra.mxu0 %v560
        %588 = vmatprep.subr.mxu0 0.0
        %589 = vmatpush1.msra.mxu0 %v559
        %590 = vmatprep.subr.mxu0 0.0
        %591 = vmatpush1.msra.mxu0 %v558
        %592 = vmatprep.subr.mxu0 0.0
        %593 = vmatpush1.msra.mxu0 %v557
        %594 = vmatprep.subr.mxu0 0.0
        %595 = vmatpush1.msra.mxu0 %v556
        %596 = vmatprep.subr.mxu0 0.0
        %597 = vmatpush1.msra.mxu0 %v555
        %598 = vmatprep.subr.mxu0 0.0
        %599 = vmatpush1.msra.mxu0 %v554
        %600 = vmatprep.subr.mxu0 0.0
        %601 = vmatpush1.msra.mxu0 %v553
        %602 = vmatprep.subr.mxu0 0.0
        %603 = vmatpush1.msra.mxu0 %v552
        %604 = vmatprep.subr.mxu0 0.0
        %605 = vmatpush1.msra.mxu0 %v551
        %606 = vmatprep.subr.mxu0 0.0
        %607 = vmatpush2.msra.mxu0 0.0
        %608 = vmatprep.subr.mxu0 0.0
        %609 = vmatpush2.msra.mxu0 0.0
        %610 = vmatprep.subr.mxu0 0.0
        %611 = vmatpush2.msra.mxu0 0.0
        %612 = vmatprep.subr.mxu0 0.0
        %613 = vmatpush2.msra.mxu0 0.0
        %614 = vmatprep.subr.mxu0 0.0
        %615 = vmatpush2.msra.mxu0 0.0
        %616 = vmatprep.subr.mxu0 0.0
        %617 = vmatpush2.msra.mxu0 0.0
        %618 = vmatprep.subr.mxu0 0.0
        %619 = vmatpush2.msra.mxu0 0.0
        %620 = vmatprep.subr.mxu0 0.0
        %621 = vmatpush2.msra.mxu0 0.0
        %622 = vmatprep.subr.mxu0 0.0
        %623 = vmatpush2.msra.mxu0 0.0
        %624 = vmatprep.subr.mxu0 0.0
        %625 = vmatpush2.msra.mxu0 0.0
        %626 = vmatprep.subr.mxu0 0.0
        %627 = vmatpush2.msra.mxu0 0.0
        %628 = vmatprep.subr.mxu0 0.0
        %629 = vmatpush2.msra.mxu0 0.0
        %630 = vmatprep.subr.mxu0 0.0
        %631 = vmatpush2.msra.mxu0 0.0
        %632 = vmatprep.subr.mxu0 0.0
        %633 = vmatpush2.msra.mxu0 0.0
        %634 = vmatprep.subr.mxu0 0.0
        %635 = vmatpush2.msra.mxu0 0.0
        %636 = vmatprep.subr.mxu0 0.0
        %637 = vmatpush2.msra.mxu0 0.0
        %638 = vmatprep.mubr.f32.mxu0 0.0
        %639 = vmatmul.mubr.f32.gmra.mxu0 %v550
        %v640 = vpop.f32.mrf.mxu0
        %v641 = vadd.f32 %v572, %v640
        %v642 = vpop.f32.mrf.mxu0
        %643 = vdwg.mxu0
        %v644 = vmax.f32 %v641, 0.0
        %v645 = vld [vmem:[#allocation7] sm:$0xff]
        %v646 = vld [vmem:[#allocation7 + $0x8] sm:$0xff]
        %v647 = vld [vmem:[#allocation7 + $0x10] sm:$0xff]
        %v648 = vld [vmem:[#allocation7 + $0x18] sm:$0xff]
        %v649 = vld [vmem:[#allocation7 + $0x20] sm:$0xff]
        %v650 = vld [vmem:[#allocation7 + $0x28] sm:$0xff]
        %v651 = vld [vmem:[#allocation7 + $0x30] sm:$0xff]
        %v652 = vld [vmem:[#allocation7 + $0x38] sm:$0xff]
        %v653 = vld [vmem:[#allocation7 + $0x40] sm:$0xff]
        %v654 = vld [vmem:[#allocation7 + $0x48] sm:$0xff]
        %v655 = vld [vmem:[#allocation7 + $0x50] sm:$0xff]
        %v656 = vld [vmem:[#allocation7 + $0x58] sm:$0xff]
        %v657 = vld [vmem:[#allocation7 + $0x60] sm:$0xff]
        %v658 = vld [vmem:[#allocation7 + $0x68] sm:$0xff]
        %v659 = vld [vmem:[#allocation7 + $0x70] sm:$0xff]
        %v660 = vld [vmem:[#allocation7 + $0x78] sm:$0xff]
        %v661 = vld [vmem:[%s8] sm:$0x1]
        %v663 = vlaneseq
        %v664 = vshrl.u32 %v663, 7
        %v665 = vsub.s32 0, %v664
        %v666 = vrot.slane %v661, %v665
        %668 = vmatprep.subr.mxu0 0.0
        %669 = vmatpush1.msra.mxu0 %v660
        %670 = vmatprep.subr.mxu0 0.0
        %671 = vmatpush1.msra.mxu0 %v659
        %672 = vmatprep.subr.mxu0 0.0
        %673 = vmatpush1.msra.mxu0 %v658
        %674 = vmatprep.subr.mxu0 0.0
        %675 = vmatpush1.msra.mxu0 %v657
        %676 = vmatprep.subr.mxu0 0.0
        %677 = vmatpush1.msra.mxu0 %v656
        %678 = vmatprep.subr.mxu0 0.0
        %679 = vmatpush1.msra.mxu0 %v655
        %680 = vmatprep.subr.mxu0 0.0
        %681 = vmatpush1.msra.mxu0 %v654
        %682 = vmatprep.subr.mxu0 0.0
        %683 = vmatpush1.msra.mxu0 %v653
        %684 = vmatprep.subr.mxu0 0.0
        %685 = vmatpush1.msra.mxu0 %v652
        %686 = vmatprep.subr.mxu0 0.0
        %687 = vmatpush1.msra.mxu0 %v651
        %688 = vmatprep.subr.mxu0 0.0
        %689 = vmatpush1.msra.mxu0 %v650
        %690 = vmatprep.subr.mxu0 0.0
        %691 = vmatpush1.msra.mxu0 %v649
        %692 = vmatprep.subr.mxu0 0.0
        %693 = vmatpush1.msra.mxu0 %v648
        %694 = vmatprep.subr.mxu0 0.0
        %695 = vmatpush1.msra.mxu0 %v647
        %696 = vmatprep.subr.mxu0 0.0
        %697 = vmatpush1.msra.mxu0 %v646
        %698 = vmatprep.subr.mxu0 0.0
        %699 = vmatpush1.msra.mxu0 %v645
        %700 = vmatprep.subr.mxu0 0.0
        %701 = vmatpush2.msra.mxu0 0.0
        %702 = vmatprep.subr.mxu0 0.0
        %703 = vmatpush2.msra.mxu0 0.0
        %704 = vmatprep.subr.mxu0 0.0
        %705 = vmatpush2.msra.mxu0 0.0
        %706 = vmatprep.subr.mxu0 0.0
        %707 = vmatpush2.msra.mxu0 0.0
        %708 = vmatprep.subr.mxu0 0.0
        %709 = vmatpush2.msra.mxu0 0.0
        %710 = vmatprep.subr.mxu0 0.0
        %711 = vmatpush2.msra.mxu0 0.0
        %712 = vmatprep.subr.mxu0 0.0
        %713 = vmatpush2.msra.mxu0 0.0
        %714 = vmatprep.subr.mxu0 0.0
        %715 = vmatpush2.msra.mxu0 0.0
        %716 = vmatprep.subr.mxu0 0.0
        %717 = vmatpush2.msra.mxu0 0.0
        %718 = vmatprep.subr.mxu0 0.0
        %719 = vmatpush2.msra.mxu0 0.0
        %720 = vmatprep.subr.mxu0 0.0
        %721 = vmatpush2.msra.mxu0 0.0
        %722 = vmatprep.subr.mxu0 0.0
        %723 = vmatpush2.msra.mxu0 0.0
        %724 = vmatprep.subr.mxu0 0.0
        %725 = vmatpush2.msra.mxu0 0.0
        %726 = vmatprep.subr.mxu0 0.0
        %727 = vmatpush2.msra.mxu0 0.0
        %728 = vmatprep.subr.mxu0 0.0
        %729 = vmatpush2.msra.mxu0 0.0
        %730 = vmatprep.subr.mxu0 0.0
        %731 = vmatpush2.msra.mxu0 0.0
        %732 = vmatprep.mubr.f32.mxu0 0.0
        %733 = vmatmul.mubr.f32.gmra.mxu0 %v644
        %v734 = vpop.f32.mrf.mxu0
        %v735 = vadd.f32 %v666, %v734
        %v736 = vpop.f32.mrf.mxu0
        %737 = vdwg.mxu0
        %738 = vst [vmem:[%s367] sm:$0xff] %v735
        %s739 = sand.u32 %s227, 1
        %s740 = scalar_lea.sflag [#allocation4], %s739
        %s741 = sand.u32 %s227, 1
        %s742 = smul.addr %s741, 8
        %s743 = scalar_lea.vmem [#allocation8], %s742
        // Predicated region
        $region69: #{tpu_custom_call.1} parent=55 // pred_check
          %p744 = pneg %p237
        $region70: #{tpu_custom_call.1} parent=55 // pred_check_branch
          %746 = sbr.rel (%p744) target = $region72
        $region71: #{tpu_custom_call.1} parent=55 // pred_region
          %s748 = ssub.s32 128, 128
          %749 = vsyncadd %s740, %s748
          %s750 = smul.addr %s25, 128
          %s751 = scalar_lea.hbm %s9, %s750
          %s753 = sshll.u32 %s743, 4
          %s754 = int_to_ptr.vmem [resolvable:$true] %s753
          %756 = dma.vmem_to_hbm [thread:$0]  %s754, 128, %s751, %s740
        $region72: #{tpu_custom_call.1} parent=55 // pred_fallthru
          _
      $region56: #{tpu_custom_call.1} parent=5 // pred_fallthru
        _
      %p757 = scmp.le.s32.totalorder 2, %s20
      // Predicated region
      $region73: #{tpu_custom_call.1} parent=5 // pred_check
        %p758 = pneg %p757
      $region74: #{tpu_custom_call.1} parent=5 // pred_check_branch
        %760 = sbr.rel (%p758) target = $region76
      $region75: #{tpu_custom_call.1} parent=5 // pred_region
        %s761 = ssub.s32 %s20, 2
        // Predicated region
        $region77: #{tpu_custom_call.1} parent=75 // pred_check
          %p762 = pneg %p243
        $region78: #{tpu_custom_call.1} parent=75 // pred_check_branch
          %764 = sbr.rel (%p762) target = $region80
        $region79: #{tpu_custom_call.1} parent=75 // pred_region
          %s765 = sand.u32 %s228, 1
          %s766 = scalar_lea.sflag [#allocation4], %s765
          %s767 = sand.u32 %s228, 1
          %s768 = smul.addr %s767, 8
          %s769 = scalar_lea.vmem [#allocation8], %s768
          %770 = dma.done %s766, 128
        $region80: #{tpu_custom_call.1} parent=75 // pred_fallthru
          _
      $region76: #{tpu_custom_call.1} parent=5 // pred_fallthru
        _
    $region6: #{tpu_custom_call.1} parent=1 // loop_footer
      %s24 = sadd.s32 1, %s20
    $region7: #{tpu_custom_call.1} parent=1 // loop_footer_branch
      %19 = sbr.rel target = $region3
    $region8: #{tpu_custom_call.1} parent=1 // loop_exit
      _
    %771 = vsyncpa [#allocation3], 1
    %s772 = scalar_lea.sflag [#allocation3], 1
    %773 = vsyncpa %s772, 1
    %774 = vsyncpa [#allocation6], 1
    %775 = vsyncpa [#allocation4], 1
    %s776 = scalar_lea.sflag [#allocation4], 1
    %777 = vsyncpa %s776, 1

</llo_original>
